<compile_context>
chip_gen: v5e
topology: v5e:2x2
jax: 0.10.0
libtpu: 0.0.40
codegen_flags: <defaults>
</compile_context>

<pallas_src>
import jax
import jax.numpy as jnp
from jax import lax
from jax.experimental import pallas as pl
from jax.experimental.pallas import tpu as pltpu


_SUBLANE = 8
# Conservative resident-table budget so the fast path also fits v7x's smaller
# scoped-VMEM default (32 MiB of 64 MiB physical); v5e/v6e have more headroom.
_VMEM_RESIDENT_BUDGET_BYTES = 24 * 1024 * 1024
_MAX_BATCH_TILE = 256


def _round_up(x, m):
    return ((x + m - 1) // m) * m


def _onehot_gather_kernel(labels_ref, table_ref, out_ref):
    """out[b, :] = table[labels[b], :] via a one-hot MXU matmul.

    labels_ref: (TB, 1) int32, VMEM
    table_ref:  (V, D) embedding table, resident in VMEM (same block each step)
    out_ref:    (TB, D) lane-dense output tile
    """
    tb = out_ref.shape[0]
    v = table_ref.shape[0]
    cols = lax.broadcasted_iota(jnp.int32, (tb, v), 1)
    onehot = (cols == labels_ref[...]).astype(table_ref.dtype)
    out_ref[...] = jnp.dot(
        onehot, table_ref[...], preferred_element_type=jnp.float32
    ).astype(out_ref.dtype)


def _row_copy_kernel(labels_ref, row_ref, out_ref):
    # Large-table fallback: the data-dependent index_map already DMA'd the
    # requested embedding row, so the body is a straight tile copy.
    del labels_ref
    out_ref[...] = row_ref[...]


def class_embedder_forward(labels, embedding_table, *, num_class, dropout_prob,
                           training=False, drop_key=None):
    """Pallas implementation of ClassEmbedder.forward.

    labels:           int array of shape (B,)
    embedding_table:  float array of shape (num_class + use_cfg, embed_dim)
    returns:          (B, 1, embed_dim) embeddings
    """
    use_cfg = int(dropout_prob > 0)
    V, D = embedding_table.shape
    assert V == num_class + use_cfg, (
        f"table rows {V} != num_class + use_cfg = {num_class + use_cfg}")

    if training and dropout_prob > 0:
        # token_drop (classifier-free-guidance label dropout) — plain-JAX glue
        # on the tiny (B,) label vector.
        # TODO(synk): fuse this RNG in-kernel (pltpu.prng_seed/prng_random_bits)
        # if this tiny op ever shows up in a profile.
        assert drop_key is not None
        drop_ids = jax.random.uniform(drop_key, (labels.shape[0],)) < dropout_prob
        labels = jnp.where(drop_ids, num_class, labels)

    # Clamp: Mosaic does no runtime bounds check on data-dependent block
    # indices (fallback path), and clamped labels keep the one-hot path from
    # silently producing zero rows for out-of-range inputs.
    labels = jnp.clip(labels.astype(jnp.int32), 0, V - 1)
    B = labels.shape[0]

    dtype = embedding_table.dtype
    itemsize = jnp.dtype(dtype).itemsize

    tb = min(_MAX_BATCH_TILE, _round_up(B, _SUBLANE))
    b_pad = _round_up(B, tb)

    table_bytes = V * D * itemsize
    # resident table (constant block index => single-buffered) + double-buffered
    # labels/output tiles + the in-kernel one-hot intermediate.
    fast_path_bytes = (table_bytes
                       + 2 * tb * (D * itemsize + 4)
                       + tb * V * itemsize)

    if fast_path_bytes <= _VMEM_RESIDENT_BUDGET_BYTES:
        # Fast path: batch-tiled one-hot MXU gather with the table resident.
        labels_2d = jnp.pad(labels, (0, b_pad - B)).reshape(b_pad, 1)
        out2d = pl.pallas_call(
            _onehot_gather_kernel,
            grid=(b_pad // tb,),
            in_specs=[pl.BlockSpec((tb, 1), lambda i: (i, 0)),
                      pl.BlockSpec((V, D), lambda i: (0, 0))],
            out_specs=pl.BlockSpec((tb, D), lambda i: (i, 0)),
            out_shape=jax.ShapeDtypeStruct((b_pad, D), dtype),
            compiler_params=pltpu.CompilerParams(
                dimension_semantics=("parallel",)),
        )(labels_2d, embedding_table)
    else:
        # Fallback for huge tables: per-row data-dependent gather via scalar
        # prefetch; reads only the B requested rows from HBM.  Deeper input
        # buffering keeps several small row DMAs in flight.
        b_pad_rows = _round_up(B, _SUBLANE)
        labels_1d = jnp.pad(labels, (0, b_pad_rows - B))
        out2d = pl.pallas_call(
            _row_copy_kernel,
            grid_spec=pltpu.PrefetchScalarGridSpec(
                num_scalar_prefetch=1,          # labels -> SMEM
                grid=(b_pad_rows,),
                in_specs=[pl.BlockSpec((1, D), lambda b, lbl: (lbl[b], 0),
                                       pipeline_mode=pl.Buffered(4))],
                out_specs=pl.BlockSpec((1, D), lambda b, lbl: (b, 0))),
            out_shape=jax.ShapeDtypeStruct((b_pad_rows, D), dtype),
            compiler_params=pltpu.CompilerParams(
                dimension_semantics=("arbitrary",)),
        )(labels_1d, embedding_table)

    # PyTorch `.unsqueeze(1)` -> free reshape in the wrapper: (B, 1, D).
    return out2d[:B][:, None, :]


if __name__ == "__main__":
    # Module config (small, deterministic).
    num_class = 10
    embed_dim = 128
    dropout_prob = 0.1                      # > 0 -> cfg embedding row exists
    use_cfg_embedding = int(dropout_prob > 0)
    vocab = num_class + use_cfg_embedding   # 11 rows

    key = jax.random.PRNGKey(0)
    k_table, k_labels = jax.random.split(key)

    # Deterministic "nn.Embedding" weight init (synthetic, not a checkpoint).
    embedding_table = jax.random.normal(k_table, (vocab, embed_dim),
                                        dtype=jnp.float32)

    # Example labels (batch=8), values in [0, num_class).
    labels = jax.random.randint(k_labels, (8,), 0, num_class, dtype=jnp.int32)

    # Forward pass (eval mode: no token drop, matching self.training == False).
    out = class_embedder_forward(labels, embedding_table,
                                 num_class=num_class,
                                 dropout_prob=dropout_prob,
                                 training=False)
    out = jax.block_until_ready(out)

    # Reference check against plain-JAX embedding lookup + unsqueeze(1).
    ref = jnp.take(embedding_table, labels, axis=0)[:, None, :]
    assert out.shape == (8, 1, embed_dim), out.shape
    assert jnp.allclose(out, ref), "mismatch vs reference embedding lookup"

    print("KERNEL_OK")
</pallas_src>

<mosaic_0001>
module attributes {stable_mosaic.version = 11 : i64} {
  func.func @_onehot_gather_kernel(%arg0: i32, %arg1: memref<8x1xi32, #tpu.memory_space<vmem>>, %arg2: memref<11x128xf32, #tpu.memory_space<vmem>>, %arg3: memref<8x128xf32, #tpu.memory_space<vmem>>) attributes {dimension_semantics = [#tpu.dimension_semantics<parallel>], iteration_bounds = array<i64: 1>, scalar_prefetch = 0 : i64, scratch_operands = 0 : i64, tpu.core_type = #tpu.core_type<tc>, window_params = [{transform_indices = @transform_0, window_bounds = array<i64: 8, 1>}, {pipeline_mode = #tpu.pipeline_mode<synchronous>, transform_indices = @transform_1, window_bounds = array<i64: 11, 128>}, {transform_indices = @transform_2, window_bounds = array<i64: 8, 128>}]} {
    %0 = tpu.iota {dimensions = array<i32: 1>} : vector<8x11xi32>
    %c0 = arith.constant 0 : index
    %c0_0 = arith.constant 0 : index
    %1 = vector.load %arg1[%c0, %c0_0] : memref<8x1xi32, #tpu.memory_space<vmem>>, vector<8x1xi32>
    %2 = vector.broadcast %1 : vector<8x1xi32> to vector<8x11xi32>
    %3 = arith.cmpi eq, %0, %2 : vector<8x11xi32>
    %4 = arith.extui %3 : vector<8x11xi1> to vector<8x11xi32>
    %5 = arith.sitofp %4 : vector<8x11xi32> to vector<8x11xf32>
    %c0_1 = arith.constant 0 : index
    %c0_2 = arith.constant 0 : index
    %6 = vector.load %arg2[%c0_1, %c0_2] : memref<11x128xf32, #tpu.memory_space<vmem>>, vector<11x128xf32>
    %cst = arith.constant dense<0.000000e+00> : vector<8x128xf32>
    %7 = tpu.matmul %5, %6, %cst {dimension_numbers = #tpu.dot_dimension_numbers<[1], [0], [0], [1], [0, 0, 1, 1], [], []>} : vector<8x11xf32>, vector<11x128xf32>, vector<8x128xf32> -> vector<8x128xf32>
    %c0_3 = arith.constant 0 : index
    %c0_4 = arith.constant 0 : index
    %8 = vector.load %arg3[%c0_3, %c0_4] : memref<8x128xf32, #tpu.memory_space<vmem>>, vector<8x128xf32>
    tpu.vector_store %arg3[%c0_3, %c0_4], %7 {strides = array<i32>} : memref<8x128xf32, #tpu.memory_space<vmem>>, vector<8x128xf32>,
    return
  }
  func.func @transform_0(%arg0: i32) -> (i32, i32) {
    %c0_i32 = arith.constant 0 : i32
    %c0_i32_0 = arith.constant 0 : i32
    return %arg0, %c0_i32 : i32, i32
  }
  func.func @transform_1(%arg0: i32) -> (i32, i32) {
    %c0_i32 = arith.constant 0 : i32
    %c0_i32_0 = arith.constant 0 : i32
    %c0_i32_1 = arith.constant 0 : i32
    return %c0_i32, %c0_i32_0 : i32, i32
  }
  func.func @transform_2(%arg0: i32) -> (i32, i32) {
    %c0_i32 = arith.constant 0 : i32
    %c0_i32_0 = arith.constant 0 : i32
    return %arg0, %c0_i32 : i32, i32
  }
}

</mosaic_0001>

<llo_original>
// kernel: tpu_custom_call.1
$region0: #{tpu_custom_call.1}
  #allocation0 [shape = 'u32[]', space=smem, size = 0x4, offset = 0x4, fixed_abs, tag = 'smem constant byte address 0x4 - core index']
  #allocation1 [shape = 'u32[72,128]{1,0:T(1,128)}', space=vmem, size = 0x9000, scoped, tag = 'internal scratch']
  %s0 = inlined_call_operand.vmem [shape: s32[8,1], index: 0, kind: input, shape index: {}]
  %s1 = inlined_call_operand.hbm [shape: f32[11,128], index: 1, kind: input, shape index: {}]
  %s2 = inlined_call_operand.hbm [shape: f32[8,128], index: 2, kind: output, shape index: {}]
  %s3 = sld [smem:[#allocation0]]
  $region22: #{tpu_custom_call.1} parent=0
    _
  %s5 = ssub.s32 1, %s3
  %s6 = scalar_select 0, %s5, %s3
  $region1: #{tpu_custom_call.1} parent=0
    #allocation2 [shape = 'u8[8192]{0}', space=vmem, size = 0x2000, scoped, tag = 'input window, operand 1, single buffered']
    #allocation3 [shape = 's32[1]{0}', space=sflag, size = 0x4, scoped, tag = 'scoped memory for tpu_custom_call.1']
    #allocation4 [shape = 's32[1]{0}', space=sflag, size = 0x4, scoped, tag = 'scoped memory for tpu_custom_call.1']
    #allocation5 [shape = 'u8[4096]{0}', space=vmem, size = 0x1000, scoped, tag = 'output window, operand 0, single buffered']
    %7 = vsyncpa [#allocation3], 0
    %8 = vsyncpa [#allocation4], 0
    // Predicated region
    $region2: #{tpu_custom_call.1} parent=1 // pred_check
      _
    $region3: #{tpu_custom_call.1} parent=1 // pred_check_branch
      %10 = sbr.rel (0) target = $region5
    $region4: #{tpu_custom_call.1} parent=1 // pred_region
      _
    $region5: #{tpu_custom_call.1} parent=1 // pred_fallthru
      _
    // Predicated region
    $region6: #{tpu_custom_call.1} parent=1 // pred_check
      _
    $region7: #{tpu_custom_call.1} parent=1 // pred_check_branch
      %12 = sbr.rel (0) target = $region9
    $region8: #{tpu_custom_call.1} parent=1 // pred_region
      %14 = vsyncadd [#allocation3], 0
      %s15 = sshll.u32 %s1, 4
      %s16 = int_to_ptr.hbm [resolvable:$true] %s15
      %s17 = sshll.u32 [#allocation2], 4
      %s18 = int_to_ptr.vmem [resolvable:$true] %s17
      %23 = dma.hbm_to_vmem [thread:$0]  %s16, 256, %s18, [#allocation3], 128, 128, 8
    $region9: #{tpu_custom_call.1} parent=1 // pred_fallthru
      _
    // Predicated region
    $region10: #{tpu_custom_call.1} parent=1 // pred_check
      _
    $region11: #{tpu_custom_call.1} parent=1 // pred_check_branch
      %25 = sbr.rel (0) target = $region13
    $region12: #{tpu_custom_call.1} parent=1 // pred_region
      %27 = dma.done [#allocation3], 256
    $region13: #{tpu_custom_call.1} parent=1 // pred_fallthru
      _
    %v28 = vlaneseq
    %v29 = vand.u32 %v28, 127
    %v30 = vld [vmem:[%s0] sm:$0xff]
    %31 = vset.pattern.permute.xlu0 0
    %32 = vperm.xlu0 %31, %v30
    %v33 = vpop.permute.xlu0 %32
    %vm34 = vcmp.eq.s32.totalorder %v29, %v33
    %v35 = vsel %vm34, 1, 0
    %v36 = vcvt.s32.f32 %v35
    %v37 = vld [vmem:[#allocation2] sm:$0xff]
    %v38 = vld [vmem:[#allocation2 + $0x8] sm:$0x7]
    %vm39 = vcmask 89088
    %v41 = vsel %vm39, %v36, 0
    %vm43 = vcmask 1042432
    %v45 = vsel %vm43, %v38, 0
    %47 = vmatpush.msra.mxu0 0.0
    %48 = vmatpush.msra.mxu0 0.0
    %49 = vmatpush.msra.mxu0 0.0
    %50 = vmatpush.msra.mxu0 0.0
    %51 = vmatpush.msra.mxu0 0.0
    %52 = vmatpush.msra.mxu0 0.0
    %53 = vmatpush.msra.mxu0 0.0
    %54 = vmatpush.msra.mxu0 0.0
    %55 = vmatpush.msra.mxu0 0.0
    %56 = vmatpush.msra.mxu0 0.0
    %57 = vmatpush.msra.mxu0 0.0
    %58 = vmatpush.msra.mxu0 0.0
    %59 = vmatpush.msra.mxu0 0.0
    %60 = vmatpush.msra.mxu0 0.0
    %61 = vmatpush.msra.mxu0 %v45
    %62 = vmatpush.msra.mxu0 %v37
    %63 = vmatmul.f32.gmra.mxu0 %v41
    %v64 = vpop.f32.mrf.mxu0
    %v65 = vadd.f32 0.0, %v64
    %66 = vdwg.mxu0
    %67 = vst [vmem:[#allocation5] sm:$0xff] %v65
    // Predicated region
    $region14: #{tpu_custom_call.1} parent=1 // pred_check
      _
    $region15: #{tpu_custom_call.1} parent=1 // pred_check_branch
      %69 = sbr.rel (0) target = $region17
    $region16: #{tpu_custom_call.1} parent=1 // pred_region
      %71 = vsyncadd [#allocation4], 0
      %s73 = sshll.u32 [#allocation5], 4
      %s74 = int_to_ptr.vmem [resolvable:$true] %s73
      %s75 = sshll.u32 %s2, 4
      %s76 = int_to_ptr.hbm [resolvable:$true] %s75
      %78 = dma.vmem_to_hbm [thread:$0]  %s74, 128, %s76, [#allocation4]
    $region17: #{tpu_custom_call.1} parent=1 // pred_fallthru
      _
    // Predicated region
    $region18: #{tpu_custom_call.1} parent=1 // pred_check
      _
    $region19: #{tpu_custom_call.1} parent=1 // pred_check_branch
      %80 = sbr.rel (0) target = $region21
    $region20: #{tpu_custom_call.1} parent=1 // pred_region
      %82 = dma.done [#allocation4], 128
    $region21: #{tpu_custom_call.1} parent=1 // pred_fallthru
      _
    %83 = vsyncpa [#allocation3], 1
    %84 = vsyncpa [#allocation4], 1

</llo_original>
